<compile_context>
chip_gen: v5e
topology: v5e:2x2
jax: 0.10.0
libtpu: 0.0.40
codegen_flags: <defaults>
</compile_context>

<pallas_src>
import math
from functools import partial

import jax
import jax.numpy as jnp
from jax import lax
from jax.experimental import pallas as pl
from jax.experimental.pallas import tpu as pltpu

_MASK_VALUE = -1e30                 # finite large-negative mask (no inf-inf NaN hazard)
_HALF_MASK = _MASK_VALUE * 0.5
_VMEM_LIMIT = 48 * 1024 * 1024      # conservative: fits v7x (64 MiB) as well as v5e/v6e


# ---------------------------------------------------------------------------
# Tiled matmul kernel (fused QKV projection and output projection)
# bf16 operands on the MXU, f32 accumulation in VMEM scratch.
# ---------------------------------------------------------------------------

def _matmul_kernel(x_ref, w_ref, o_ref, acc_ref):
    @pl.when(pl.program_id(2) == 0)
    def _init():
        acc_ref[...] = jnp.zeros_like(acc_ref)

    acc_ref[...] += jnp.dot(x_ref[...], w_ref[...],
                            preferred_element_type=jnp.float32)

    @pl.when(pl.program_id(2) == pl.num_programs(2) - 1)
    def _fin():
        o_ref[...] = acc_ref[...].astype(o_ref.dtype)


def _pick_tile(dim, pref, align):
    """Largest tile <= pref that divides `dim` and is `align`-aligned, else full dim."""
    if dim <= pref or dim % align != 0:
        return dim
    t = (pref // align) * align
    while t >= align:
        if dim % t == 0:
            return t
        t -= align
    return dim


def linear_matmul(x2d, w_t, *, bm=256, bn=256, bk=1024, out_dtype=None):
    """y = x2d @ w_t, where w_t is the pre-transposed (in_features, out_features) weight."""
    M, K = x2d.shape
    K2, N = w_t.shape
    assert K == K2
    if out_dtype is None:
        out_dtype = x2d.dtype
    bm = _pick_tile(M, bm, 8)
    bn = _pick_tile(N, bn, 128)
    bk = _pick_tile(K, bk, 128)
    grid = (M // bm, N // bn, K // bk)
    return pl.pallas_call(
        _matmul_kernel,
        out_shape=jax.ShapeDtypeStruct((M, N), out_dtype),
        grid=grid,
        in_specs=[pl.BlockSpec((bm, bk), lambda i, j, k: (i, k)),
                  pl.BlockSpec((bk, bn), lambda i, j, k: (k, j))],
        out_specs=pl.BlockSpec((bm, bn), lambda i, j, k: (i, j)),
        scratch_shapes=[pltpu.VMEM((bm, bn), jnp.float32)],
        compiler_params=pltpu.CompilerParams(
            dimension_semantics=("parallel", "parallel", "arbitrary"),
            vmem_limit_bytes=_VMEM_LIMIT),
    )(x2d, w_t)


# ---------------------------------------------------------------------------
# Flash-style sliding-window attention kernel (GQA head-group batched)
# ---------------------------------------------------------------------------

def _flash_swa_kernel(q_ref, k_ref, v_ref, o_ref, m_sc, l_sc, acc_sc,
                      *, window, block, nb, n_rep, head_dim):
    qi = pl.program_id(2)      # query block index
    j = pl.program_id(3)       # local kv step (0 .. nb-1)

    @pl.when(j == 0)
    def _init():
        m_sc[...] = jnp.full_like(m_sc, _MASK_VALUE)
        l_sc[...] = jnp.zeros_like(l_sc)
        acc_sc[...] = jnp.zeros_like(acc_sc)

    # Actual kv block visited this step; must match the K/V index_map below.
    kv_blk = jnp.maximum(qi - (nb - 1), 0) + j
    rows = n_rep * block

    def scores():
        # q_ref: (n_rep, block, D); the n_rep query heads share k_ref/v_ref (GQA).
        # Flatten heads into rows -> one (n_rep*block, D) x (D, block) MXU matmul.
        q2 = q_ref[...].reshape(rows, head_dim)                        # bf16
        return lax.dot_general(q2, k_ref[...], (((1,), (1,)), ((), ())),
                               preferred_element_type=jnp.float32)     # (rows, block) f32

    def update(s, guard_fully_masked_rows):
        # Online softmax; statistics kept in f32 (v5e-safe), p fed to PV in bf16.
        m_prev = m_sc[...]
        m_new = jnp.maximum(m_prev, jnp.max(s, axis=-1, keepdims=True))
        alpha = jnp.exp(m_prev - m_new)
        p = jnp.exp(s - m_new)
        if guard_fully_masked_rows:
            # Rows that have not yet seen any unmasked score contribute nothing
            # (do not rely on exp(-1e30) underflow to cancel garbage later).
            p = jnp.where(m_new > _HALF_MASK, p, 0.0)
        l_sc[...] = alpha * l_sc[...] + jnp.sum(p, axis=-1, keepdims=True)
        acc_sc[...] = alpha * acc_sc[...] + lax.dot_general(
            p.astype(v_ref.dtype), v_ref[...], (((1,), (0,)), ((), ())),
            preferred_element_type=jnp.float32)
        m_sc[...] = m_new

    on_diag = kv_blk == qi
    valid = kv_blk <= qi                       # strictly-future blocks are fully masked
    if window is None:
        needs_mask = on_diag
    else:
        needs_mask = on_diag | ((qi - kv_blk) * block + (block - 1) >= window)

    @pl.when(valid & needs_mask)
    def _masked_step():
        s = scores()
        row = qi * block + lax.broadcasted_iota(jnp.int32, (rows, block), 0) % block
        col = kv_blk * block + lax.broadcasted_iota(jnp.int32, (rows, block), 1)
        mask = col > row                                   # causal: triu(ones, 1)
        if window is not None:                             # sliding window: tril(ones, -window)
            mask = mask | ((row - col) >= window)
        update(jnp.where(mask, _MASK_VALUE, s), guard_fully_masked_rows=True)

    @pl.when(valid & jnp.logical_not(needs_mask))
    def _unmasked_step():                                  # interior in-window block: no mask math
        update(scores(), guard_fully_masked_rows=False)

    @pl.when(j == nb - 1)
    def _fin():
        inv_l = pl.reciprocal(l_sc[...], approx=True)
        out = (acc_sc[...] * inv_l).reshape(n_rep, block, head_dim)
        o_ref[...] = out.astype(o_ref.dtype)


def sliding_window_attention_core(q, k, v, window, *, block_q=256, block_kv=256):
    """q: (B, H, S, D); k, v: (B, KVH, S, D) -> (B, H, S, D).

    GQA: grid axis 1 runs over KV heads; the Q/O BlockSpec covers the whole group of
    n_rep query heads sharing that KV head, so K/V are DMA'd once per group.
    """
    B, H, S, D = q.shape
    KVH = k.shape[1]
    assert H % KVH == 0
    n_rep = H // KVH

    block = min(block_q, block_kv, S)
    assert S % block == 0, "seq_len must be divisible by the attention block size"
    num_blocks = S // block

    if window is None:
        nb = num_blocks                                   # full causal
    else:
        w = max(1, min(int(window), S))
        nb = min(num_blocks, math.ceil((w - 1) / block) + 1)

    def q_map(b, g, qi, j):
        return (b, g, qi, 0)

    def kv_map(b, g, qi, j):
        # Only window-relevant kv blocks are visited.
        return (b, g, jnp.maximum(qi - (nb - 1), 0) + j, 0)

    kernel = partial(_flash_swa_kernel, window=window, block=block, nb=nb,
                     n_rep=n_rep, head_dim=D)

    return pl.pallas_call(
        kernel,
        out_shape=jax.ShapeDtypeStruct((B, H, S, D), q.dtype),
        grid=(B, KVH, num_blocks, nb),
        in_specs=[pl.BlockSpec((None, n_rep, block, D), q_map),
                  pl.BlockSpec((None, None, block, D), kv_map),
                  pl.BlockSpec((None, None, block, D), kv_map)],
        out_specs=pl.BlockSpec((None, n_rep, block, D), q_map),
        scratch_shapes=[pltpu.VMEM((n_rep * block, 1), jnp.float32),   # running max
                        pltpu.VMEM((n_rep * block, 1), jnp.float32),   # running denom
                        pltpu.VMEM((n_rep * block, D), jnp.float32)],  # output accumulator
        compiler_params=pltpu.CompilerParams(
            dimension_semantics=("parallel", "parallel", "parallel", "arbitrary"),
            vmem_limit_bytes=_VMEM_LIMIT),
    )(q, k, v)


# ---------------------------------------------------------------------------
# Glue (plain JAX): RoPE, parameter prep, full forward
# ---------------------------------------------------------------------------

def rotate_half(x):
    d = x.shape[-1]
    return jnp.concatenate([-x[..., d // 2:], x[..., :d // 2]], axis=-1)


def apply_rotary_pos_emb(q, k, cos, sin):
    # q, k: (B, S, H, D); cos, sin: (S, D); unsqueeze_dim=1 -> (S, 1, D) broadcast.
    dt = q.dtype
    q32, k32 = q.astype(jnp.float32), k.astype(jnp.float32)
    cos = cos.astype(jnp.float32)[:, None, :]
    sin = sin.astype(jnp.float32)[:, None, :]
    qe = q32 * cos + rotate_half(q32) * sin
    ke = k32 * cos + rotate_half(k32) * sin
    return qe.astype(dt), ke.astype(dt)


def repeat_kv(x, n_rep):   # only used by the pure-JAX reference
    return x if n_rep == 1 else jnp.repeat(x, n_rep, axis=2)


def prepare_params(params, cfg):
    """One-time weight prep: fold 1/sqrt(D) into q_proj, fuse QKV, transpose, cast bf16."""
    H = cfg["num_attention_heads"]
    D = cfg["hidden_size"] // H
    scale = 1.0 / math.sqrt(D)
    wq_scaled = params["q_proj"] * scale                      # commutes with RoPE (linear)
    wqkv_t = jnp.concatenate([wq_scaled, params["k_proj"], params["v_proj"]],
                             axis=0).T.astype(jnp.bfloat16)
    return {
        "wqkv_t": wqkv_t,                                     # (hidden, (H+2*KVH)*D) bf16
        "wo_t": params["o_proj"].T.astype(jnp.bfloat16),      # (H*D, hidden) bf16
        "cos": params["cos"],
        "sin": params["sin"],
    }


def sliding_window_attention_forward(x, prepared, cfg, *,
                                     block_q=256, block_kv=256,
                                     block_m=256, block_n=256, block_k=1024):
    """Forward pass (eval mode, no cache, no attention_mask)."""
    B, S, Hdim = x.shape
    H = cfg["num_attention_heads"]
    KVH = cfg["num_key_value_heads"]
    D = Hdim // H
    window = cfg["sliding_window"]

    # Fused QKV projection in bf16 (single HBM read of x, bf16 writeback).
    x2d = x.reshape(B * S, Hdim).astype(jnp.bfloat16)
    qkv = linear_matmul(x2d, prepared["wqkv_t"], bm=block_m, bn=block_n, bk=block_k,
                        out_dtype=jnp.bfloat16)
    qd, kvd = H * D, KVH * D
    xq = qkv[:, :qd].reshape(B, S, H, D)
    xk = qkv[:, qd:qd + kvd].reshape(B, S, KVH, D)
    xv = qkv[:, qd + kvd:].reshape(B, S, KVH, D)

    cos, sin = prepared["cos"][:S], prepared["sin"][:S]
    xq, xk = apply_rotary_pos_emb(xq, xk, cos, sin)

    # (B, S, h, D) -> (B, h, S, D), in bf16 (half the layout-pass traffic).
    # TODO(synk): absorb these layout transposes + RoPE into the attention BlockSpec
    # index_maps / kernel (size-1 head-group blocks over a second-minor axis hit the
    # (8,128) block constraint, so this still goes through XLA for now).
    xq = jnp.transpose(xq, (0, 2, 1, 3))
    xk = jnp.transpose(xk, (0, 2, 1, 3))
    xv = jnp.transpose(xv, (0, 2, 1, 3))

    out = sliding_window_attention_core(xq, xk, xv, window,
                                        block_q=block_q, block_kv=block_kv)

    out = jnp.transpose(out, (0, 2, 1, 3)).reshape(B * S, H * D)
    out = linear_matmul(out, prepared["wo_t"], bm=block_m, bn=block_n, bk=block_k,
                        out_dtype=jnp.float32).reshape(B, S, Hdim)
    return out  # past_kv is None (use_cache=False); resid_dropout is identity in eval


# ---------------------------------------------------------------------------
# Pure-JAX reference (correctness check, f32 / highest precision)
# ---------------------------------------------------------------------------

def reference_forward(x, params, cfg):
    B, S, Hdim = x.shape
    H = cfg["num_attention_heads"]
    KVH = cfg["num_key_value_heads"]
    D = Hdim // H
    n_rep = H // KVH
    window = cfg["sliding_window"]
    hp = jax.lax.Precision.HIGHEST

    xq = jnp.einsum("bsh,oh->bso", x, params["q_proj"], precision=hp).reshape(B, S, H, D)
    xk = jnp.einsum("bsh,oh->bso", x, params["k_proj"], precision=hp).reshape(B, S, KVH, D)
    xv = jnp.einsum("bsh,oh->bso", x, params["v_proj"], precision=hp).reshape(B, S, KVH, D)
    xq, xk = apply_rotary_pos_emb(xq, xk, params["cos"][:S], params["sin"][:S])
    xk = repeat_kv(xk, n_rep)
    xv = repeat_kv(xv, n_rep)
    xq, xk, xv = (jnp.transpose(t, (0, 2, 1, 3)) for t in (xq, xk, xv))

    scores = jnp.einsum("bhqd,bhkd->bhqk", xq, xk, precision=hp) / math.sqrt(D)
    row = jnp.arange(S)[:, None]
    col = jnp.arange(S)[None, :]
    mask = (col > row) | ((row - col) >= window)
    scores = jnp.where(mask, -jnp.inf, scores)
    attn = jax.nn.softmax(scores, axis=-1)
    out = jnp.einsum("bhqk,bhkd->bhqd", attn, xv, precision=hp)
    out = jnp.transpose(out, (0, 2, 1, 3)).reshape(B, S, H * D)
    return jnp.einsum("bso,ho->bsh", out, params["o_proj"], precision=hp)


# ---------------------------------------------------------------------------
# Main
# ---------------------------------------------------------------------------

if __name__ == "__main__":
    cfg = dict(
        hidden_size=64,
        num_attention_heads=4,
        num_key_value_heads=2,
        sliding_window=16,
        rope_theta=1e6,
        max_position_embeddings=64,
    )
    B, S = 2, 32
    Hdim = cfg["hidden_size"]
    H = cfg["num_attention_heads"]
    KVH = cfg["num_key_value_heads"]
    D = Hdim // H

    key = jax.random.PRNGKey(0)
    kx, kq, kk, kv, ko = jax.random.split(key, 5)
    x = jax.random.normal(kx, (B, S, Hdim), dtype=jnp.float32)

    init_std = 0.02
    params = {
        "q_proj": init_std * jax.random.normal(kq, (H * D, Hdim), jnp.float32),
        "k_proj": init_std * jax.random.normal(kk, (KVH * D, Hdim), jnp.float32),
        "v_proj": init_std * jax.random.normal(kv, (KVH * D, Hdim), jnp.float32),
        "o_proj": init_std * jax.random.normal(ko, (Hdim, H * D), jnp.float32),
    }
    # Deterministic RoPE tables: (max_pos, head_dim), concat(freqs, freqs).
    inv_freq = 1.0 / (cfg["rope_theta"] ** (jnp.arange(0, D, 2, dtype=jnp.float32) / D))
    pos = jnp.arange(cfg["max_position_embeddings"], dtype=jnp.float32)
    angles = pos[:, None] * inv_freq[None, :]
    emb = jnp.concatenate([angles, angles], axis=-1)
    params["cos"] = jnp.cos(emb)
    params["sin"] = jnp.sin(emb)

    prepared = prepare_params(params, cfg)

    # Small blocks so the toy shapes still exercise every kernel path: masked diagonal
    # blocks, mask-free interior blocks, skipped fully-future blocks, multi-step online
    # softmax, GQA head-group batching (n_rep=2) and tiled matmuls.  At real sizes the
    # defaults (block_q=block_kv=256, matmul 256x256x1024) apply.
    out = sliding_window_attention_forward(x, prepared, cfg,
                                           block_q=8, block_kv=8,
                                           block_m=32, block_n=256, block_k=1024)
    out = jax.block_until_ready(out)

    ref = jax.block_until_ready(reference_forward(x, params, cfg))
    assert out.shape == (B, S, Hdim)
    assert jnp.allclose(out, ref, rtol=3e-2, atol=3e-3), "mismatch vs. pure-JAX reference"

    print("KERNEL_OK")
</pallas_src>

<mosaic_0001>
module attributes {stable_mosaic.version = 11 : i64} {
  func.func @_matmul_kernel(%arg0: i32, %arg1: i32, %arg2: i32, %arg3: memref<32x64xbf16, #tpu.memory_space<vmem>>, %arg4: memref<64x128xbf16, #tpu.memory_space<vmem>>, %arg5: memref<32x128xbf16, #tpu.memory_space<vmem>>, %arg6: memref<32x128xf32, #tpu.memory_space<vmem>>) attributes {dimension_semantics = [#tpu.dimension_semantics<parallel>, #tpu.dimension_semantics<parallel>, #tpu.dimension_semantics<arbitrary>], iteration_bounds = array<i64: 2, 1, 1>, scalar_prefetch = 0 : i64, scratch_operands = 1 : i64, tpu.core_type = #tpu.core_type<tc>, window_params = [{transform_indices = @transform_0, window_bounds = array<i64: 32, 64>}, {transform_indices = @transform_1, window_bounds = array<i64: 64, 128>}, {transform_indices = @transform_2, window_bounds = array<i64: 32, 128>}]} {
    %c0_i32 = arith.constant 0 : i32
    %0 = arith.cmpi eq, %arg2, %c0_i32 : i32
    %1 = arith.extui %0 : i1 to i32
    %c0_i32_0 = arith.constant 0 : i32
    %2 = arith.cmpi ne, %1, %c0_i32_0 : i32
    scf.if %2 {
      %cst_10 = arith.constant 0.000000e+00 : f32
      %12 = vector.broadcast %cst_10 : f32 to vector<32x128xf32>
      %c0_11 = arith.constant 0 : index
      %c0_12 = arith.constant 0 : index
      %13 = vector.load %arg6[%c0_11, %c0_12] : memref<32x128xf32, #tpu.memory_space<vmem>>, vector<32x128xf32>
      tpu.vector_store %arg6[%c0_11, %c0_12], %12 {strides = array<i32>} : memref<32x128xf32, #tpu.memory_space<vmem>>, vector<32x128xf32>,
    } else {
    }
    %c0 = arith.constant 0 : index
    %c0_1 = arith.constant 0 : index
    %3 = vector.load %arg6[%c0, %c0_1] : memref<32x128xf32, #tpu.memory_space<vmem>>, vector<32x128xf32>
    %c0_2 = arith.constant 0 : index
    %c0_3 = arith.constant 0 : index
    %4 = vector.load %arg3[%c0_2, %c0_3] : memref<32x64xbf16, #tpu.memory_space<vmem>>, vector<32x64xbf16>
    %c0_4 = arith.constant 0 : index
    %c0_5 = arith.constant 0 : index
    %5 = vector.load %arg4[%c0_4, %c0_5] : memref<64x128xbf16, #tpu.memory_space<vmem>>, vector<64x128xbf16>
    %cst = arith.constant dense<0.000000e+00> : vector<32x128xf32>
    %6 = tpu.matmul %4, %5, %cst {dimension_numbers = #tpu.dot_dimension_numbers<[1], [0], [0], [1], [0, 0, 1, 1], [], []>} : vector<32x64xbf16>, vector<64x128xbf16>, vector<32x128xf32> -> vector<32x128xf32>
    %7 = arith.addf %3, %6 : vector<32x128xf32>
    %c0_6 = arith.constant 0 : index
    %c0_7 = arith.constant 0 : index
    %8 = vector.load %arg6[%c0_6, %c0_7] : memref<32x128xf32, #tpu.memory_space<vmem>>, vector<32x128xf32>
    tpu.vector_store %arg6[%c0_6, %c0_7], %7 {strides = array<i32>} : memref<32x128xf32, #tpu.memory_space<vmem>>, vector<32x128xf32>,
    %c0_i32_8 = arith.constant 0 : i32
    %9 = arith.cmpi eq, %arg2, %c0_i32_8 : i32
    %10 = arith.extui %9 : i1 to i32
    %c0_i32_9 = arith.constant 0 : i32
    %11 = arith.cmpi ne, %10, %c0_i32_9 : i32
    scf.if %11 {
      %c0_10 = arith.constant 0 : index
      %c0_11 = arith.constant 0 : index
      %12 = vector.load %arg6[%c0_10, %c0_11] : memref<32x128xf32, #tpu.memory_space<vmem>>, vector<32x128xf32>
      %13 = arith.truncf %12 : vector<32x128xf32> to vector<32x128xbf16>
      %c0_12 = arith.constant 0 : index
      %c0_13 = arith.constant 0 : index
      %14 = vector.load %arg5[%c0_12, %c0_13] : memref<32x128xbf16, #tpu.memory_space<vmem>>, vector<32x128xbf16>
      tpu.vector_store %arg5[%c0_12, %c0_13], %13 {strides = array<i32>} : memref<32x128xbf16, #tpu.memory_space<vmem>>, vector<32x128xbf16>,
    } else {
    }
    return
  }
  func.func @transform_0(%arg0: i32, %arg1: i32, %arg2: i32) -> (i32, i32) {
    %c0_i32 = arith.constant 0 : i32
    return %arg0, %arg2 : i32, i32
  }
  func.func @transform_1(%arg0: i32, %arg1: i32, %arg2: i32) -> (i32, i32) {
    %c0_i32 = arith.constant 0 : i32
    return %arg2, %arg1 : i32, i32
  }
  func.func @transform_2(%arg0: i32, %arg1: i32, %arg2: i32) -> (i32, i32) {
    %c0_i32 = arith.constant 0 : i32
    return %arg0, %arg1 : i32, i32
  }
}

</mosaic_0001>

<llo_original>
// kernel: tpu_custom_call.1
$region0: #{tpu_custom_call.1}
  #allocation0 [shape = 'u32[]', space=smem, size = 0x4, offset = 0x4, fixed_abs, tag = 'smem constant byte address 0x4 - core index']
  #allocation1 [shape = 'u32[72,128]{1,0:T(1,128)}', space=vmem, size = 0x9000, scoped, tag = 'internal scratch']
  #allocation2 [shape = 'f32[32,128]{1,0:T(8,128)}', space=vmem, size = 0x4000, scoped, tag = 'scratch operand']
  %s0 = inlined_call_operand.hbm [shape: bf16[64,64], index: 0, kind: input, shape index: {}]
  %s1 = inlined_call_operand.hbm [shape: bf16[64,128], index: 1, kind: input, shape index: {}]
  %s2 = inlined_call_operand.hbm [shape: bf16[64,128], index: 2, kind: output, shape index: {}]
  %s3 = sld [smem:[#allocation0]]
  $region57: #{tpu_custom_call.1} parent=0
    _
  %s5 = ssub.s32 1, %s3
  %s6 = scalar_select 0, %s5, %s3
  $region1: #{tpu_custom_call.1} parent=0
    #allocation3 [shape = 'u8[16384]{0}', space=vmem, size = 0x4000, scoped, tag = 'input window, operand 0']
    #allocation4 [shape = 's32[2]{0}', space=sflag, size = 0x8, scoped, tag = 'scoped memory for tpu_custom_call.1']
    #allocation5 [shape = 's32[2]{0}', space=sflag, size = 0x8, scoped, tag = 'scoped memory for tpu_custom_call.1']
    #allocation6 [shape = 'u8[16384]{0}', space=vmem, size = 0x4000, scoped, tag = 'input window, operand 1, single buffered']
    #allocation7 [shape = 's32[1]{0}', space=sflag, size = 0x4, scoped, tag = 'scoped memory for tpu_custom_call.1']
    #allocation8 [shape = 'u8[16384]{0}', space=vmem, size = 0x4000, scoped, tag = 'output window, operand 0']
    %7 = vsyncpa [#allocation4], 0
    %s8 = scalar_lea.sflag [#allocation4], 1
    %9 = vsyncpa %s8, 0
    %10 = vsyncpa [#allocation7], 0
    %11 = vsyncpa [#allocation5], 0
    %s12 = scalar_lea.sflag [#allocation5], 1
    %13 = vsyncpa %s12, 0
    loop: start=0, step=1, limit=4
    $region2: #{tpu_custom_call.1} parent=1 // loop_pre_header
      _
    $region3: #{tpu_custom_call.1} parent=1 // loop_header
      %s15 = sphi 0, %s19
      %p16 = scmp.ge.s32.totalorder %s15, 4
      %s22 = sphi 0, %s41
      %s23 = sphi 0, %s37
      %s24 = sphi 0, %s33
      %s25 = sphi 0, %s22
      %s26 = sphi 0, %s23
      %s27 = sphi 0, %s24
      %s28 = sphi 0, %s25
      %s29 = sphi 0, %s26
      %s30 = sphi 0, %s27
      %s46 = sphi 0, %s48
      %s49 = sphi 0, %s46
      %s50 = sphi 0, %s49
      %s66 = sphi 0, %s50
      %s74 = sphi 0, %s76
      %s77 = sphi 0, %s74
      %s78 = sphi 0, %s77
      %s94 = sphi 0, %s78
      %s102 = sphi 0, %s104
      %s105 = sphi 0, %s102
      %s106 = sphi 0, %s105
      %s122 = sphi 0, %s106
    $region4: #{tpu_custom_call.1} parent=1 // loop_header_branch
      %18 = sbr.rel (%p16) target = $region8
    $region5: #{tpu_custom_call.1} parent=1 // loop_body
      %s20 = ssub.s32 %s15, 1
      %s21 = ssub.s32 %s15, 2
      %s31 = sadd.s32 1, %s24
      %p32 = scmp.ge.s32.totalorder %s31, 1
      %s33 = scalar_select %p32, 0, %s31
      %s34 = sadd.s32 1, %s23
      %s35 = scalar_select %p32, %s34, %s23
      %p36 = scmp.ge.s32.totalorder %s35, 1
      %s37 = scalar_select %p36, 0, %s35
      %s38 = sadd.s32 1, %s22
      %s39 = scalar_select %p36, %s38, %s22
      %p40 = scmp.ge.s32.totalorder %s39, 2
      %s41 = scalar_select %p40, 0, %s39
      %s42 = ssub.s32 %s22, %s41
      %s43 = ssub.s32 %s24, %s33
      %s44 = sor.u32 %s42, %s43
      %p45 = scmp.eq.s32.totalorder %s44, 0
      %s47 = sadd.s32 %s46, 1
      %s48 = scalar_select %p45, %s46, %s47
      %p51 = pneg %p45
      %p52 = scmp.eq.s32.totalorder %s15, 1
      %p53 = por %p51, %p52
      %p54 = scmp.ne.s32.totalorder %s46, %s49
      %p55 = scmp.eq.s32.totalorder %s15, 0
      %p56 = por %p54, %p55
      %p57 = scmp.ne.s32.totalorder %s46, %s49
      %p58 = scmp.eq.s32.totalorder %s20, 1
      %p59 = por %p57, %p58
      %p60 = scmp.ne.s32.totalorder %s49, %s50
      %p61 = scmp.eq.s32.totalorder %s20, 0
      %p62 = por %p60, %p61
      %p63 = scmp.ne.s32.totalorder %s49, %s50
      %p64 = scmp.eq.s32.totalorder %s21, 1
      %p65 = por %p63, %p64
      %p67 = scmp.ne.s32.totalorder %s50, %s66
      %p68 = scmp.eq.s32.totalorder %s21, 0
      %p69 = por %p67, %p68
      %s70 = ssub.s32 %s24, %s33
      %s71 = ssub.s32 %s23, %s37
      %s72 = sor.u32 %s70, %s71
      %p73 = scmp.eq.s32.totalorder %s72, 0
      %s75 = sadd.s32 %s74, 1
      %s76 = scalar_select %p73, %s74, %s75
      %p79 = pneg %p73
      %p80 = scmp.eq.s32.totalorder %s15, 1
      %p81 = por %p79, %p80
      %p82 = scmp.ne.s32.totalorder %s74, %s77
      %p83 = scmp.eq.s32.totalorder %s15, 0
      %p84 = por %p82, %p83
      %p85 = scmp.ne.s32.totalorder %s74, %s77
      %p86 = scmp.eq.s32.totalorder %s20, 1
      %p87 = por %p85, %p86
      %p88 = scmp.ne.s32.totalorder %s77, %s78
      %p89 = scmp.eq.s32.totalorder %s20, 0
      %p90 = por %p88, %p89
      %p91 = scmp.ne.s32.totalorder %s77, %s78
      %p92 = scmp.eq.s32.totalorder %s21, 1
      %p93 = por %p91, %p92
      %p95 = scmp.ne.s32.totalorder %s78, %s94
      %p96 = scmp.eq.s32.totalorder %s21, 0
      %p97 = por %p95, %p96
      %s98 = ssub.s32 %s22, %s41
      %s99 = ssub.s32 %s23, %s37
      %s100 = sor.u32 %s98, %s99
      %p101 = scmp.eq.s32.totalorder %s100, 0
      %s103 = sadd.s32 %s102, 1
      %s104 = scalar_select %p101, %s102, %s103
      %p107 = pneg %p101
      %p108 = scmp.eq.s32.totalorder %s15, 1
      %p109 = por %p107, %p108
      %p110 = scmp.ne.s32.totalorder %s102, %s105
      %p111 = scmp.eq.s32.totalorder %s15, 0
      %p112 = por %p110, %p111
      %p113 = scmp.ne.s32.totalorder %s102, %s105
      %p114 = scmp.eq.s32.totalorder %s20, 1
      %p115 = por %p113, %p114
      %p116 = scmp.ne.s32.totalorder %s105, %s106
      %p117 = scmp.eq.s32.totalorder %s20, 0
      %p118 = por %p116, %p117
      %p119 = scmp.ne.s32.totalorder %s105, %s106
      %p120 = scmp.eq.s32.totalorder %s21, 1
      %p121 = por %p119, %p120
      %p123 = scmp.ne.s32.totalorder %s106, %s122
      %p124 = scmp.eq.s32.totalorder %s21, 0
      %p125 = por %p123, %p124
      %p126 = scmp.le.s32.totalorder 1, %s15
      %p127 = scmp.lt.s32.totalorder %s15, 3
      %p128 = pnand %p126, %p127
      %p129 = pneg %p128
      // Predicated region
      $region9: #{tpu_custom_call.1} parent=5 // pred_check
        _
      $region10: #{tpu_custom_call.1} parent=5 // pred_check_branch
        %131 = sbr.rel (%p128) target = $region12
      $region11: #{tpu_custom_call.1} parent=5 // pred_region
        %s132 = ssub.s32 %s15, 1
        // Predicated region
        $region13: #{tpu_custom_call.1} parent=11 // pred_check
          %p133 = pneg %p90
        $region14: #{tpu_custom_call.1} parent=11 // pred_check_branch
          %135 = sbr.rel (%p133) target = $region16
        $region15: #{tpu_custom_call.1} parent=11 // pred_region
          %s136 = smul.u32 8, %s27
          %138 = vsyncadd [#allocation7], 0
          %s139 = sadd.s32 %s26, %s136
          %s140 = smul.addr %s139, 4
          %s141 = scalar_lea.hbm %s1, %s140
          %s142 = sshll.u32 %s141, 4
          %s143 = int_to_ptr.hbm [resolvable:$true] %s142
          %s144 = sshll.u32 [#allocation6], 4
          %s145 = int_to_ptr.vmem [resolvable:$true] %s144
          %150 = dma.hbm_to_vmem [thread:$0]  %s143, 512, %s145, [#allocation7], 64, 64, 4
        $region16: #{tpu_custom_call.1} parent=11 // pred_fallthru
          _
      $region12: #{tpu_custom_call.1} parent=5 // pred_fallthru
        _
      %p151 = scmp.lt.s32.totalorder %s15, 2
      // Predicated region
      $region17: #{tpu_custom_call.1} parent=5 // pred_check
        %p152 = pneg %p151
      $region18: #{tpu_custom_call.1} parent=5 // pred_check_branch
        %154 = sbr.rel (%p152) target = $region20
      $region19: #{tpu_custom_call.1} parent=5 // pred_region
        // Predicated region
        $region21: #{tpu_custom_call.1} parent=19 // pred_check
          %p155 = pneg %p56
        $region22: #{tpu_custom_call.1} parent=19 // pred_check_branch
          %157 = sbr.rel (%p155) target = $region24
        $region23: #{tpu_custom_call.1} parent=19 // pred_region
          %s158 = sand.u32 %s46, 1
          %s159 = scalar_lea.sflag [#allocation4], %s158
          %s160 = sand.u32 %s46, 1
          %s161 = smul.addr %s160, 16
          %s162 = scalar_lea.vmem [#allocation3], %s161
          %s163 = smul.u32 4, %s22
          %165 = vsyncadd %s159, 0
          %s166 = sadd.s32 %s24, %s163
          %s167 = smul.addr %s166, 4
          %s168 = scalar_lea.hbm %s0, %s167
          %s169 = sshll.u32 %s168, 4
          %s170 = int_to_ptr.hbm [resolvable:$true] %s169
          %s171 = sshll.u32 %s162, 4
          %s172 = int_to_ptr.vmem [resolvable:$true] %s171
          %177 = dma.hbm_to_vmem [thread:$0]  %s170, 256, %s172, %s159, 64, 64, 4
        $region24: #{tpu_custom_call.1} parent=19 // pred_fallthru
          _
      $region20: #{tpu_custom_call.1} parent=5 // pred_fallthru
        _
      %p178 = scmp.le.s32.totalorder 1, %s15
      %p179 = scmp.lt.s32.totalorder %s15, 3
      %p180 = pnand %p178, %p179
      %p181 = pneg %p180
      // Predicated region
      $region25: #{tpu_custom_call.1} parent=5 // pred_check
        _
      $region26: #{tpu_custom_call.1} parent=5 // pred_check_branch
        %183 = sbr.rel (%p180) target = $region28
      $region27: #{tpu_custom_call.1} parent=5 // pred_region
        %s184 = ssub.s32 %s15, 1
        %s185 = sand.u32 %s49, 1
        %s186 = scalar_lea.sflag [#allocation4], %s185
        %s187 = sand.u32 %s49, 1
        %s188 = smul.addr %s187, 16
        %s189 = scalar_lea.vmem [#allocation3], %s188
        // Predicated region
        $region29: #{tpu_custom_call.1} parent=27 // pred_check
          %p190 = pneg %p62
        $region30: #{tpu_custom_call.1} parent=27 // pred_check_branch
          %192 = sbr.rel (%p190) target = $region32
        $region31: #{tpu_custom_call.1} parent=27 // pred_region
          %194 = dma.done %s186, 256
        $region32: #{tpu_custom_call.1} parent=27 // pred_fallthru
          _
        // Predicated region
        $region33: #{tpu_custom_call.1} parent=27 // pred_check
          %p195 = pneg %p90
        $region34: #{tpu_custom_call.1} parent=27 // pred_check_branch
          %197 = sbr.rel (%p195) target = $region36
        $region35: #{tpu_custom_call.1} parent=27 // pred_region
          %199 = dma.done [#allocation7], 512
        $region36: #{tpu_custom_call.1} parent=27 // pred_fallthru
          _
        %s200 = sand.u32 %s49, 1
        %s201 = scalar_lea.sflag [#allocation4], %s200
        %s202 = sand.u32 %s49, 1
        %s203 = smul.addr %s202, 16
        %s204 = scalar_lea.vmem [#allocation3], %s203
        %p205 = pneg %p62
        %p206 = pneg %p59
        %p207 = pneg %p90
        %p208 = pneg %p87
        %p209 = pneg %p118
        %p210 = pneg %p115
        %s211 = sand.u32 %s105, 1
        %s212 = scalar_lea.sflag [#allocation5], %s211
        %s213 = sand.u32 %s105, 1
        %s214 = smul.addr %s213, 16
        %s215 = scalar_lea.vmem [#allocation8], %s214
        %s216 = smul.u32 4, %s25
        %s217 = smul.u32 8, %s27
        %s218 = smul.u32 4, %s25
        %p220 = scmp.eq.s32.totalorder %s27, 0
        // Predicated region
        $region37: #{tpu_custom_call.1} parent=27 // pred_check
          %p221 = pneg %p220
        $region38: #{tpu_custom_call.1} parent=27 // pred_check_branch
          %223 = sbr.rel (%p221) target = $region40
        $region39: #{tpu_custom_call.1} parent=27 // pred_region
          %224 = vst [vmem:[#allocation2] sm:$0xff] 0.0
          %225 = vst [vmem:[#allocation2 + $0x8] sm:$0xff] 0.0
          %226 = vst [vmem:[#allocation2 + $0x10] sm:$0xff] 0.0
          %227 = vst [vmem:[#allocation2 + $0x18] sm:$0xff] 0.0
        $region40: #{tpu_custom_call.1} parent=27 // pred_fallthru
          _
        %v228 = vld [vmem:[#allocation2] sm:$0xff]
        %v229 = vld [vmem:[#allocation2 + $0x8] sm:$0xff]
        %v230 = vld [vmem:[#allocation2 + $0x10] sm:$0xff]
        %v231 = vld [vmem:[#allocation2 + $0x18] sm:$0xff]
        %v232 = vld [vmem:[%s189] sm:$0xf]
        %v233 = vld [vmem:[%s189 + $0x4] sm:$0xf]
        %v234 = vld [vmem:[%s189 + $0x8] sm:$0xf]
        %v235 = vld [vmem:[%s189 + $0xc] sm:$0xf]
        %v236 = vld [vmem:[#allocation6] sm:$0xf]
        %v237 = vld [vmem:[#allocation6 + $0x4] sm:$0xf]
        %v238 = vld [vmem:[#allocation6 + $0x8] sm:$0xf]
        %v239 = vld [vmem:[#allocation6 + $0xc] sm:$0xf]
        %v240 = vld [vmem:[#allocation6 + $0x10] sm:$0xf]
        %v241 = vld [vmem:[#allocation6 + $0x14] sm:$0xf]
        %v242 = vld [vmem:[#allocation6 + $0x18] sm:$0xf]
        %v243 = vld [vmem:[#allocation6 + $0x1c] sm:$0xf]
        %v248 = vunpack.c.l.b16 %v232
        %v249 = vunpack.c.l.b16 %v233
        %v250 = vunpack.c.l.b16 %v234
        %v251 = vunpack.c.l.b16 %v235
        %v252 = vpack.c.b16 %v249, %v248
        %v253 = vpack.c.b16 %v251, %v250
        %v262 = vunpack.c.l.b16 %v236
        %v263 = vunpack.c.l.b16 %v237
        %v264 = vunpack.c.l.b16 %v238
        %v265 = vunpack.c.l.b16 %v239
        %v266 = vunpack.c.l.b16 %v240
        %v267 = vunpack.c.l.b16 %v241
        %v268 = vunpack.c.l.b16 %v242
        %v269 = vunpack.c.l.b16 %v243
        %v270 = vpack.c.b16 %v263, %v262
        %v271 = vpack.c.b16 %v265, %v264
        %v272 = vpack.c.b16 %v267, %v266
        %v273 = vpack.c.b16 %v269, %v268
        %vm278 = vcmask 523264
        %v280 = vsel %vm278, %v252, 0
        %v283 = vsel %vm278, %v253, 0
        %285 = vmatpush.bf16.msra.mxu0 0
        %286 = vmatpush.bf16.msra.mxu0 0
        %287 = vmatpush.bf16.msra.mxu0 0
        %288 = vmatpush.bf16.msra.mxu0 0
        %289 = vmatpush.bf16.msra.mxu0 %v273
        %290 = vmatpush.bf16.msra.mxu0 %v272
        %291 = vmatpush.bf16.msra.mxu0 %v271
        %292 = vmatpush.bf16.msra.mxu0 %v270
        %293 = vmatmul.bf16.gmra.mxu0 %v280
        %v294 = vpop.f32.mrf.mxu0
        %v295 = vadd.f32 0.0, %v294
        %v296 = vpop.f32.mrf.mxu0
        %v297 = vadd.f32 0.0, %v296
        %298 = vmatmul.bf16.gmra.mxu0 %v283
        %v299 = vpop.f32.mrf.mxu0
        %v300 = vadd.f32 0.0, %v299
        %v301 = vpop.f32.mrf.mxu0
        %v302 = vadd.f32 0.0, %v301
        %303 = vdwg.mxu0
        %v304 = vadd.f32 %v228, %v295
        %v305 = vadd.f32 %v229, %v297
        %v306 = vadd.f32 %v230, %v300
        %v307 = vadd.f32 %v231, %v302
        %308 = vst [vmem:[#allocation2] sm:$0xff] %v304
        %309 = vst [vmem:[#allocation2 + $0x8] sm:$0xff] %v305
        %310 = vst [vmem:[#allocation2 + $0x10] sm:$0xff] %v306
        %311 = vst [vmem:[#allocation2 + $0x18] sm:$0xff] %v307
        // Predicated region
        $region41: #{tpu_custom_call.1} parent=27 // pred_check
          %p312 = pneg %p220
        $region42: #{tpu_custom_call.1} parent=27 // pred_check_branch
          %314 = sbr.rel (%p312) target = $region44
        $region43: #{tpu_custom_call.1} parent=27 // pred_region
          %v315 = vld [vmem:[#allocation2] sm:$0xff]
          %v316 = vld [vmem:[#allocation2 + $0x8] sm:$0xff]
          %v317 = vld [vmem:[#allocation2 + $0x10] sm:$0xff]
          %v318 = vld [vmem:[#allocation2 + $0x18] sm:$0xff]
          %v319 = vpack.c.bf16 %v315, %v315
          %v320 = vpack.c.bf16 %v316, %v316
          %v321 = vpack.c.bf16 %v317, %v317
          %v322 = vpack.c.bf16 %v318, %v318
          %323 = vst [vmem:[%s215] sm:$0xf] %v319
          %324 = vst [vmem:[%s215 + $0x4] sm:$0xf] %v320
          %325 = vst [vmem:[%s215 + $0x8] sm:$0xf] %v321
          %326 = vst [vmem:[%s215 + $0xc] sm:$0xf] %v322
        $region44: #{tpu_custom_call.1} parent=27 // pred_fallthru
          _
        %s327 = sand.u32 %s105, 1
        %s328 = scalar_lea.sflag [#allocation5], %s327
        %s329 = sand.u32 %s105, 1
        %s330 = smul.addr %s329, 16
        %s331 = scalar_lea.vmem [#allocation8], %s330
        // Predicated region
        $region45: #{tpu_custom_call.1} parent=27 // pred_check
          %p332 = pneg %p115
        $region46: #{tpu_custom_call.1} parent=27 // pred_check_branch
          %334 = sbr.rel (%p332) target = $region48
        $region47: #{tpu_custom_call.1} parent=27 // pred_region
          %s335 = smul.u32 4, %s25
          %337 = vsyncadd %s328, 0
          %s338 = sadd.s32 %s26, %s335
          %s339 = smul.addr %s338, 4
          %s340 = scalar_lea.hbm %s2, %s339
          %s341 = sshll.u32 %s331, 4
          %s342 = int_to_ptr.vmem [resolvable:$true] %s341
          %s343 = sshll.u32 %s340, 4
          %s344 = int_to_ptr.hbm [resolvable:$true] %s343
          %349 = dma.vmem_to_hbm [thread:$0]  %s342, 256, %s344, %s328, 64, 64, 4
        $region48: #{tpu_custom_call.1} parent=27 // pred_fallthru
          _
      $region28: #{tpu_custom_call.1} parent=5 // pred_fallthru
        _
      %p350 = scmp.le.s32.totalorder 2, %s15
      // Predicated region
      $region49: #{tpu_custom_call.1} parent=5 // pred_check
        %p351 = pneg %p350
      $region50: #{tpu_custom_call.1} parent=5 // pred_check_branch
        %353 = sbr.rel (%p351) target = $region52
      $region51: #{tpu_custom_call.1} parent=5 // pred_region
        %s354 = ssub.s32 %s15, 2
        // Predicated region
        $region53: #{tpu_custom_call.1} parent=51 // pred_check
          %p355 = pneg %p121
        $region54: #{tpu_custom_call.1} parent=51 // pred_check_branch
          %357 = sbr.rel (%p355) target = $region56
        $region55: #{tpu_custom_call.1} parent=51 // pred_region
          %s358 = sand.u32 %s106, 1
          %s359 = scalar_lea.sflag [#allocation5], %s358
          %s360 = sand.u32 %s106, 1
          %s361 = smul.addr %s360, 16
          %s362 = scalar_lea.vmem [#allocation8], %s361
          %364 = dma.done %s359, 256
        $region56: #{tpu_custom_call.1} parent=51 // pred_fallthru
          _
      $region52: #{tpu_custom_call.1} parent=5 // pred_fallthru
        _
    $region6: #{tpu_custom_call.1} parent=1 // loop_footer
      %s19 = sadd.s32 1, %s15
    $region7: #{tpu_custom_call.1} parent=1 // loop_footer_branch
      %14 = sbr.rel target = $region3
    $region8: #{tpu_custom_call.1} parent=1 // loop_exit
      _
    %365 = vsyncpa [#allocation4], 1
    %s366 = scalar_lea.sflag [#allocation4], 1
    %367 = vsyncpa %s366, 1
    %368 = vsyncpa [#allocation7], 1
    %369 = vsyncpa [#allocation5], 1
    %s370 = scalar_lea.sflag [#allocation5], 1
    %371 = vsyncpa %s370, 1

</llo_original>
